<compile_context>
chip_gen: v5e
topology: v5e:2x2
jax: 0.10.0
libtpu: 0.0.40
codegen_flags: <defaults>
</compile_context>

<pallas_src>
import functools

import numpy as np
import jax
import jax.numpy as jnp
from jax import lax
from jax.experimental import pallas as pl
from jax.experimental.pallas import tpu as pltpu

_NEG_BIG = -1e30  # finite "minus infinity": keeps max()/exp() NaN-free


def _nt_xent_cos_kernel(row_ref, col_ref, out_ref, l_sc, *, inv_t, tm, tk, exp_dtype):
    """Cosine path: fixed-max (m = 1/T) streaming logsumexp over column blocks."""
    i = pl.program_id(0)  # row block    ("parallel")
    k = pl.program_id(1)  # column block ("arbitrary", reduction axis, last)

    @pl.when(k == 0)
    def _():
        l_sc[...] = jnp.zeros_like(l_sc)

    # (TM, TK) tile of logits = sim / T.  The column operand is pre-scaled by 1/T in the
    # wrapper, so the MXU output is already the logit tile (f32 accumulation, no VPU pass).
    s = lax.dot_general(
        row_ref[...],
        col_ref[...],
        dimension_numbers=(((1,), (1,)), ((), ())),
        preferred_element_type=jnp.float32,
    )

    # Cosine logits are bounded by 1/T -> fixed max, no running-max bookkeeping.
    e = jnp.exp((s - inv_t).astype(exp_dtype)).astype(jnp.float32)
    l_sc[...] += jnp.sum(e, axis=-1, keepdims=True)

    # Only tiles whose band intersects the global diagonal pay for removing self-similarity:
    # subtract the (already computed) diagonal exp contribution from the running sum.
    @pl.when((i * tm < (k + 1) * tk) & (k * tk < (i + 1) * tm))
    def _():
        rr = i * tm + lax.broadcasted_iota(jnp.int32, (tm, tk), 0)
        cc = k * tk + lax.broadcasted_iota(jnp.int32, (tm, tk), 1)
        l_sc[...] -= jnp.sum(jnp.where(rr == cc, e, 0.0), axis=-1, keepdims=True)

    @pl.when(k == pl.num_programs(1) - 1)
    def _():
        out_ref[...] = inv_t + jnp.log(l_sc[...])  # per-row masked logsumexp


def _nt_xent_dot_kernel(row_ref, col_ref, out_ref, m_sc, l_sc, *, tm, tk):
    """Dot-similarity path (ctx=False): logits unbounded -> flash-style online logsumexp."""
    i = pl.program_id(0)
    k = pl.program_id(1)

    @pl.when(k == 0)
    def _():
        m_sc[...] = jnp.full_like(m_sc, _NEG_BIG)
        l_sc[...] = jnp.zeros_like(l_sc)

    s = lax.dot_general(
        row_ref[...],
        col_ref[...],
        dimension_numbers=(((1,), (1,)), ((), ())),
        preferred_element_type=jnp.float32,
    )

    # Self-similarity can dominate the row max here, so mask it before the running max.
    rr = i * tm + lax.broadcasted_iota(jnp.int32, (tm, tk), 0)
    cc = k * tk + lax.broadcasted_iota(jnp.int32, (tm, tk), 1)
    s = jnp.where(rr == cc, _NEG_BIG, s)

    m_prev = m_sc[...]
    m_new = jnp.maximum(m_prev, jnp.max(s, axis=-1, keepdims=True))
    alpha = jnp.exp(m_prev - m_new)
    l_sc[...] = alpha * l_sc[...] + jnp.sum(jnp.exp(s - m_new), axis=-1, keepdims=True)
    m_sc[...] = m_new

    @pl.when(k == pl.num_programs(1) - 1)
    def _():
        out_ref[...] = m_sc[...] + jnp.log(l_sc[...])


def _default_exp_dtype():
    """bf16 exp (2x EUP) on v6e/v7x; f32 on v5e and older (no bf16 EUP/VPU)."""
    try:
        kind = jax.devices()[0].device_kind.lower()
    except Exception:  # pragma: no cover - conservative fallback
        return jnp.float32
    if any(v in kind for v in ("v2", "v3", "v4", "v5")):
        return jnp.float32
    return jnp.bfloat16


def _choose_blocks(n, d, in_itemsize, vmem_budget=24 * 1024 * 1024):
    """Biggest square-ish tile fitting the VMEM budget; >= 2 row blocks for megacore/2 TCs."""
    candidates = [b for b in (1024, 512, 256, 128) if n % b == 0]
    tk = None
    for b in candidates:
        # double-buffered row + column input tiles + ~2 f32 (tm, tk) intermediates
        if 2 * 2 * b * d * in_itemsize + 2 * b * b * 4 <= vmem_budget:
            tk = b
            break
    if tk is None:
        tk = candidates[-1] if candidates else n
    tm = tk
    # Guarantee at least 2 row blocks so the "parallel" axis spans both v7x TensorCores.
    while n // tm < 2 and tm % 2 == 0 and (tm // 2) % 8 == 0 and n % (tm // 2) == 0:
        tm //= 2
    return tm, tk


def nt_xent_loss(z_i, z_j, *, temper, ctx=True, mxu_dtype=jnp.bfloat16, exp_dtype=None,
                 block=None):
    """Pallas implementation of NT_Xent.forward(z_i, z_j)."""
    bs, d = z_i.shape
    n = 2 * bs
    inv_t = 1.0 / float(temper)
    if exp_dtype is None:
        exp_dtype = _default_exp_dtype()

    zi = z_i.astype(jnp.float32)
    zj = z_j.astype(jnp.float32)
    if ctx:
        # L2-normalize rows once; the Gram matrix of normalized rows == cosine similarity.
        # (eps mirrors torch CosineSimilarity's 1e-8 clamp on the norm.)
        def _l2n(x):
            sq = jnp.sum(x * x, axis=-1, keepdims=True)
            return x * lax.rsqrt(jnp.maximum(sq, 1e-16))
        zi, zj = _l2n(zi), _l2n(zj)

    # r = cat([z_j, z_i]); positives are the paired rows i <-> i + bs: a row-wise dot of the
    # two (normalized) views -- O(bs*D), stays f32, handled in the wrapper (not streamed).
    r = jnp.concatenate([zj, zi], axis=0)                              # (N, D) f32
    pos = jnp.sum(zj * zi, axis=-1) * inv_t                            # (bs,)
    pos = jnp.concatenate([pos, pos], axis=0)                          # (N,)

    r_rows = r.astype(mxu_dtype)                                       # MXU row operand
    r_cols = (r * inv_t).astype(mxu_dtype)                             # fold 1/T into columns

    if block is None:
        tm, tk = _choose_blocks(n, d, np.dtype(mxu_dtype).itemsize)
    else:
        tm = tk = int(block)
        assert n % tm == 0 and n % tk == 0, "block size must divide 2*bs"

    if ctx:
        kernel = functools.partial(_nt_xent_cos_kernel, inv_t=inv_t, tm=tm, tk=tk,
                                   exp_dtype=exp_dtype)
        scratch = [pltpu.VMEM((tm, 1), jnp.float32)]                   # running sum
    else:
        kernel = functools.partial(_nt_xent_dot_kernel, tm=tm, tk=tk)
        scratch = [pltpu.VMEM((tm, 1), jnp.float32),                   # running max
                   pltpu.VMEM((tm, 1), jnp.float32)]                   # running sum

    lse = pl.pallas_call(
        kernel,
        out_shape=jax.ShapeDtypeStruct((n, 1), jnp.float32),
        grid_spec=pltpu.PrefetchScalarGridSpec(
            num_scalar_prefetch=0,
            grid=(n // tm, n // tk),
            in_specs=[
                pl.BlockSpec((tm, d), lambda i, k: (i, 0)),   # row block of r
                pl.BlockSpec((tk, d), lambda i, k: (k, 0)),   # column block of r (pre-scaled)
            ],
            out_specs=pl.BlockSpec((tm, 1), lambda i, k: (i, 0)),
            scratch_shapes=scratch,
        ),
        compiler_params=pltpu.CompilerParams(
            dimension_semantics=("parallel", "arbitrary"),
            vmem_limit_bytes=32 * 1024 * 1024,
        ),
    )(r_rows, r_cols)

    # CrossEntropyLoss(reduction='sum') / (2*bs); labels all zero -> sum_i (lse_i - pos_i) / N
    return jnp.sum(lse[:, 0] - pos) / n


def nt_xent_reference(z_i, z_j, bs, temper, ctx=True):
    """Pure numpy reference (intended SimCLR mask), float64."""
    zi = np.asarray(z_i, dtype=np.float64)
    zj = np.asarray(z_j, dtype=np.float64)
    r = np.concatenate([zj, zi], axis=0)
    N = 2 * bs
    if ctx:
        norms = np.linalg.norm(r, axis=-1, keepdims=True)
        sim = (r @ r.T) / np.maximum(norms * norms.T, 1e-8)
    else:
        sim = r @ r.T
    pos = np.concatenate([np.diag(sim, bs), np.diag(sim, -bs)]).reshape(N, 1)
    mask = np.ones((N, N), dtype=bool)
    np.fill_diagonal(mask, False)
    for i in range(bs):
        mask[i, bs + i] = False
        mask[bs + i, i] = False
    neg = sim[mask].reshape(N, -1)
    logits = np.concatenate([pos, neg], axis=1) / temper
    m = logits.max(axis=1, keepdims=True)
    lse = m[:, 0] + np.log(np.exp(logits - m).sum(axis=1))
    return np.sum(lse - logits[:, 0]) / N


if __name__ == "__main__":
    key = jax.random.PRNGKey(0)
    k1, k2, k3, k4 = jax.random.split(key, 4)

    # Small config consistent with the module (projection-head output, lane-aligned).
    bs, feat_dim, temper = 8, 128, 0.5
    z_i = jax.random.normal(k1, (bs, feat_dim), dtype=jnp.float32)
    z_j = jax.random.normal(k2, (bs, feat_dim), dtype=jnp.float32)

    ref_cos = nt_xent_reference(z_i, z_j, bs, temper, ctx=True)
    ref_dot = nt_xent_reference(z_i, z_j, bs, temper, ctx=False)

    # (1) cosine path, f32 MXU operands + f32 exp -> tight check vs float64 reference
    loss_f32 = jax.block_until_ready(
        nt_xent_loss(z_i, z_j, temper=temper, ctx=True,
                     mxu_dtype=jnp.float32, exp_dtype=jnp.float32))
    np.testing.assert_allclose(np.float64(loss_f32), ref_cos, rtol=1e-4, atol=1e-5)

    # (2) cosine path, default bf16 MXU operands + auto exp dtype (bf16 on v6e/v7x)
    loss_bf16 = jax.block_until_ready(
        nt_xent_loss(z_i, z_j, temper=temper, ctx=True))
    np.testing.assert_allclose(np.float64(loss_bf16), ref_cos, rtol=1e-2, atol=1e-2)

    # (3) dot-similarity path (ctx=False), f32 operands, online-logsumexp kernel
    loss_dot = jax.block_until_ready(
        nt_xent_loss(z_i, z_j, temper=temper, ctx=False, mxu_dtype=jnp.float32))
    np.testing.assert_allclose(np.float64(loss_dot), ref_dot, rtol=1e-4, atol=1e-3)

    # (4) larger batch, explicit 128 blocks: 2x2 grid exercises the gated (non-)diagonal tiles
    bs2 = 128
    z_i2 = jax.random.normal(k3, (bs2, feat_dim), dtype=jnp.float32)
    z_j2 = jax.random.normal(k4, (bs2, feat_dim), dtype=jnp.float32)
    ref_big = nt_xent_reference(z_i2, z_j2, bs2, temper, ctx=True)
    loss_big = jax.block_until_ready(
        nt_xent_loss(z_i2, z_j2, temper=temper, ctx=True, block=128))
    np.testing.assert_allclose(np.float64(loss_big), ref_big, rtol=1e-2, atol=1e-2)

    # (5) same batch, automatic block chooser (rectangular tm=128, tk=256 tiles)
    loss_auto = jax.block_until_ready(
        nt_xent_loss(z_i2, z_j2, temper=temper, ctx=True))
    np.testing.assert_allclose(np.float64(loss_auto), ref_big, rtol=1e-2, atol=1e-2)

    print("KERNEL_OK")
</pallas_src>

<mosaic_0001>
module attributes {stable_mosaic.version = 11 : i64} {
  func.func @_nt_xent_cos_kernel(%arg0: i32, %arg1: i32, %arg2: memref<8x128xf32, #tpu.memory_space<vmem>>, %arg3: memref<16x128xf32, #tpu.memory_space<vmem>>, %arg4: memref<8x1xf32, #tpu.memory_space<vmem>>, %arg5: memref<8x1xf32, #tpu.memory_space<vmem>>) attributes {dimension_semantics = [#tpu.dimension_semantics<parallel>, #tpu.dimension_semantics<arbitrary>], iteration_bounds = array<i64: 2, 1>, scalar_prefetch = 0 : i64, scratch_operands = 1 : i64, tpu.core_type = #tpu.core_type<tc>, window_params = [{transform_indices = @transform_0, window_bounds = array<i64: 8, 128>}, {transform_indices = @transform_1, window_bounds = array<i64: 16, 128>}, {transform_indices = @transform_2, window_bounds = array<i64: 8, 1>}]} {
    %c0_i32 = arith.constant 0 : i32
    %0 = arith.cmpi eq, %arg1, %c0_i32 : i32
    %1 = arith.extui %0 : i1 to i32
    %c0_i32_0 = arith.constant 0 : i32
    %2 = arith.cmpi ne, %1, %c0_i32_0 : i32
    scf.if %2 {
      %cst_16 = arith.constant 0.000000e+00 : f32
      %28 = vector.broadcast %cst_16 : f32 to vector<8x1xf32>
      %c0_17 = arith.constant 0 : index
      %c0_18 = arith.constant 0 : index
      %29 = vector.load %arg5[%c0_17, %c0_18] : memref<8x1xf32, #tpu.memory_space<vmem>>, vector<8x1xf32>
      tpu.vector_store %arg5[%c0_17, %c0_18], %28 {strides = array<i32>} : memref<8x1xf32, #tpu.memory_space<vmem>>, vector<8x1xf32>,
    } else {
    }
    %c0 = arith.constant 0 : index
    %c0_1 = arith.constant 0 : index
    %3 = vector.load %arg2[%c0, %c0_1] : memref<8x128xf32, #tpu.memory_space<vmem>>, vector<8x128xf32>
    %c0_2 = arith.constant 0 : index
    %c0_3 = arith.constant 0 : index
    %4 = vector.load %arg3[%c0_2, %c0_3] : memref<16x128xf32, #tpu.memory_space<vmem>>, vector<16x128xf32>
    %cst = arith.constant dense<0.000000e+00> : vector<8x16xf32>
    %5 = tpu.matmul %3, %4, %cst {dimension_numbers = #tpu.dot_dimension_numbers<[1], [1], [0], [0], [0, 0, 1, 0], [], []>} : vector<8x128xf32>, vector<16x128xf32>, vector<8x16xf32> -> vector<8x16xf32>
    %cst_4 = arith.constant 2.000000e+00 : f32
    %6 = vector.broadcast %cst_4 : f32 to vector<8x16xf32>
    %7 = arith.subf %5, %6 : vector<8x16xf32>
    %8 = math.exp %7 : vector<8x16xf32>
    %c0_5 = arith.constant 0 : index
    %c0_6 = arith.constant 0 : index
    %9 = vector.load %arg5[%c0_5, %c0_6] : memref<8x1xf32, #tpu.memory_space<vmem>>, vector<8x1xf32>
    %cst_7 = arith.constant dense<0.000000e+00> : vector<8xf32>
    %10 = vector.multi_reduction <add>, %8, %cst_7 [1] : vector<8x16xf32> to vector<8xf32>
    %11 = vector.shape_cast %10 : vector<8xf32> to vector<8x1xf32>
    %12 = arith.addf %9, %11 : vector<8x1xf32>
    %c0_8 = arith.constant 0 : index
    %c0_9 = arith.constant 0 : index
    %13 = vector.load %arg5[%c0_8, %c0_9] : memref<8x1xf32, #tpu.memory_space<vmem>>, vector<8x1xf32>
    tpu.vector_store %arg5[%c0_8, %c0_9], %12 {strides = array<i32>} : memref<8x1xf32, #tpu.memory_space<vmem>>, vector<8x1xf32>,
    %c8_i32 = arith.constant 8 : i32
    %14 = arith.muli %arg0, %c8_i32 : i32
    %c1_i32 = arith.constant 1 : i32
    %15 = arith.addi %arg1, %c1_i32 : i32
    %c16_i32 = arith.constant 16 : i32
    %16 = arith.muli %15, %c16_i32 : i32
    %17 = arith.cmpi slt, %14, %16 : i32
    %c16_i32_10 = arith.constant 16 : i32
    %18 = arith.muli %arg1, %c16_i32_10 : i32
    %c1_i32_11 = arith.constant 1 : i32
    %19 = arith.addi %arg0, %c1_i32_11 : i32
    %c8_i32_12 = arith.constant 8 : i32
    %20 = arith.muli %19, %c8_i32_12 : i32
    %21 = arith.cmpi slt, %18, %20 : i32
    %22 = arith.andi %17, %21 : i1
    %23 = arith.extui %22 : i1 to i32
    %c0_i32_13 = arith.constant 0 : i32
    %24 = arith.cmpi ne, %23, %c0_i32_13 : i32
    scf.if %24 {
      %c8_i32_16 = arith.constant 8 : i32
      %28 = arith.muli %arg0, %c8_i32_16 : i32
      %29 = tpu.iota {dimensions = array<i32: 0>} : vector<8x16xi32>
      %30 = vector.broadcast %28 : i32 to vector<8x16xi32>
      %31 = arith.addi %30, %29 : vector<8x16xi32>
      %c16_i32_17 = arith.constant 16 : i32
      %32 = arith.muli %arg1, %c16_i32_17 : i32
      %33 = tpu.iota {dimensions = array<i32: 1>} : vector<8x16xi32>
      %34 = vector.broadcast %32 : i32 to vector<8x16xi32>
      %35 = arith.addi %34, %33 : vector<8x16xi32>
      %c0_18 = arith.constant 0 : index
      %c0_19 = arith.constant 0 : index
      %36 = vector.load %arg5[%c0_18, %c0_19] : memref<8x1xf32, #tpu.memory_space<vmem>>, vector<8x1xf32>
      %37 = arith.cmpi eq, %31, %35 : vector<8x16xi32>
      %cst_20 = arith.constant 0.000000e+00 : f32
      %38 = vector.broadcast %cst_20 : f32 to vector<8x16xf32>
      %39 = arith.select %37, %8, %38 : vector<8x16xi1>, vector<8x16xf32>
      %cst_21 = arith.constant dense<0.000000e+00> : vector<8xf32>
      %40 = vector.multi_reduction <add>, %39, %cst_21 [1] : vector<8x16xf32> to vector<8xf32>
      %41 = vector.shape_cast %40 : vector<8xf32> to vector<8x1xf32>
      %42 = arith.subf %36, %41 : vector<8x1xf32>
      %c0_22 = arith.constant 0 : index
      %c0_23 = arith.constant 0 : index
      %43 = vector.load %arg5[%c0_22, %c0_23] : memref<8x1xf32, #tpu.memory_space<vmem>>, vector<8x1xf32>
      tpu.vector_store %arg5[%c0_22, %c0_23], %42 {strides = array<i32>} : memref<8x1xf32, #tpu.memory_space<vmem>>, vector<8x1xf32>,
    } else {
    }
    %c0_i32_14 = arith.constant 0 : i32
    %25 = arith.cmpi eq, %arg1, %c0_i32_14 : i32
    %26 = arith.extui %25 : i1 to i32
    %c0_i32_15 = arith.constant 0 : i32
    %27 = arith.cmpi ne, %26, %c0_i32_15 : i32
    scf.if %27 {
      %c0_16 = arith.constant 0 : index
      %c0_17 = arith.constant 0 : index
      %28 = vector.load %arg5[%c0_16, %c0_17] : memref<8x1xf32, #tpu.memory_space<vmem>>, vector<8x1xf32>
      %29 = math.log %28 : vector<8x1xf32>
      %cst_18 = arith.constant 2.000000e+00 : f32
      %30 = vector.broadcast %cst_18 : f32 to vector<8x1xf32>
      %31 = arith.addf %30, %29 : vector<8x1xf32>
      %c0_19 = arith.constant 0 : index
      %c0_20 = arith.constant 0 : index
      %32 = vector.load %arg4[%c0_19, %c0_20] : memref<8x1xf32, #tpu.memory_space<vmem>>, vector<8x1xf32>
      tpu.vector_store %arg4[%c0_19, %c0_20], %31 {strides = array<i32>} : memref<8x1xf32, #tpu.memory_space<vmem>>, vector<8x1xf32>,
    } else {
    }
    return
  }
  func.func @transform_0(%arg0: i32, %arg1: i32) -> (i32, i32) {
    %c0_i32 = arith.constant 0 : i32
    %c0_i32_0 = arith.constant 0 : i32
    return %arg0, %c0_i32 : i32, i32
  }
  func.func @transform_1(%arg0: i32, %arg1: i32) -> (i32, i32) {
    %c0_i32 = arith.constant 0 : i32
    %c0_i32_0 = arith.constant 0 : i32
    return %arg1, %c0_i32 : i32, i32
  }
  func.func @transform_2(%arg0: i32, %arg1: i32) -> (i32, i32) {
    %c0_i32 = arith.constant 0 : i32
    %c0_i32_0 = arith.constant 0 : i32
    return %arg0, %c0_i32 : i32, i32
  }
}

</mosaic_0001>

<llo_original>
// kernel: tpu_custom_call.1
$region0: #{tpu_custom_call.1}
  #allocation0 [shape = 'u32[]', space=smem, size = 0x4, offset = 0x4, fixed_abs, tag = 'smem constant byte address 0x4 - core index']
  #allocation1 [shape = 'u32[72,128]{1,0:T(1,128)}', space=vmem, size = 0x9000, scoped, tag = 'internal scratch']
  #allocation2 [shape = 'f32[8,1]{1,0:T(8,128)}', space=vmem, size = 0x1000, scoped, tag = 'scratch operand']
  %s0 = inlined_call_operand.hbm [shape: f32[16,128], index: 0, kind: input, shape index: {}]
  %s1 = inlined_call_operand.hbm [shape: f32[16,128], index: 1, kind: input, shape index: {}]
  %s2 = inlined_call_operand.vmem [shape: f32[16,1], index: 2, kind: output, shape index: {}]
  %s3 = sld [smem:[#allocation0]]
  $region61: #{tpu_custom_call.1} parent=0
    _
  %s5 = ssub.s32 1, %s3
  %s6 = scalar_select 0, %s5, %s3
  $region1: #{tpu_custom_call.1} parent=0
    #allocation3 [shape = 'u8[8192]{0}', space=vmem, size = 0x2000, scoped, tag = 'input window, operand 0']
    #allocation4 [shape = 's32[2]{0}', space=sflag, size = 0x8, scoped, tag = 'scoped memory for tpu_custom_call.1']
    #allocation5 [shape = 'u8[8192]{0}', space=vmem, size = 0x2000, scoped, tag = 'input window, operand 1, single buffered']
    #allocation6 [shape = 's32[1]{0}', space=sflag, size = 0x4, scoped, tag = 'scoped memory for tpu_custom_call.1']
    %7 = vsyncpa [#allocation4], 0
    %s8 = scalar_lea.sflag [#allocation4], 1
    %9 = vsyncpa %s8, 0
    %10 = vsyncpa [#allocation6], 0
    loop: start=0, step=1, limit=4
    $region2: #{tpu_custom_call.1} parent=1 // loop_pre_header
      _
    $region3: #{tpu_custom_call.1} parent=1 // loop_header
      %s12 = sphi 0, %s16
      %p13 = scmp.ge.s32.totalorder %s12, 4
      %s19 = sphi 0, %s31
      %s20 = sphi 0, %s27
      %s21 = sphi 0, %s19
      %s22 = sphi 0, %s20
      %s23 = sphi 0, %s21
      %s24 = sphi 0, %s22
      %s34 = sphi 0, %s36
      %s37 = sphi 0, %s34
      %s38 = sphi 0, %s37
      %s54 = sphi 0, %s38
      %s60 = sphi 0, %s62
      %s63 = sphi 0, %s60
      %s64 = sphi 0, %s63
      %s80 = sphi 0, %s64
      %s86 = sphi 0, %s88
      %s89 = sphi 0, %s86
      %s90 = sphi 0, %s89
      %s106 = sphi 0, %s90
    $region4: #{tpu_custom_call.1} parent=1 // loop_header_branch
      %15 = sbr.rel (%p13) target = $region8
    $region5: #{tpu_custom_call.1} parent=1 // loop_body
      %s17 = ssub.s32 %s12, 1
      %s18 = ssub.s32 %s12, 2
      %s25 = sadd.s32 1, %s20
      %p26 = scmp.ge.s32.totalorder %s25, 1
      %s27 = scalar_select %p26, 0, %s25
      %s28 = sadd.s32 1, %s19
      %s29 = scalar_select %p26, %s28, %s19
      %p30 = scmp.ge.s32.totalorder %s29, 2
      %s31 = scalar_select %p30, 0, %s29
      %s32 = ssub.s32 %s19, %s31
      %p33 = scmp.eq.s32.totalorder %s32, 0
      %s35 = sadd.s32 %s34, 1
      %s36 = scalar_select %p33, %s34, %s35
      %p39 = pneg %p33
      %p40 = scmp.eq.s32.totalorder %s12, 1
      %p41 = por %p39, %p40
      %p42 = scmp.ne.s32.totalorder %s34, %s37
      %p43 = scmp.eq.s32.totalorder %s12, 0
      %p44 = por %p42, %p43
      %p45 = scmp.ne.s32.totalorder %s34, %s37
      %p46 = scmp.eq.s32.totalorder %s17, 1
      %p47 = por %p45, %p46
      %p48 = scmp.ne.s32.totalorder %s37, %s38
      %p49 = scmp.eq.s32.totalorder %s17, 0
      %p50 = por %p48, %p49
      %p51 = scmp.ne.s32.totalorder %s37, %s38
      %p52 = scmp.eq.s32.totalorder %s18, 1
      %p53 = por %p51, %p52
      %p55 = scmp.ne.s32.totalorder %s38, %s54
      %p56 = scmp.eq.s32.totalorder %s18, 0
      %p57 = por %p55, %p56
      %s58 = ssub.s32 %s20, %s27
      %p59 = scmp.eq.s32.totalorder %s58, 0
      %s61 = sadd.s32 %s60, 1
      %s62 = scalar_select %p59, %s60, %s61
      %p65 = pneg %p59
      %p66 = scmp.eq.s32.totalorder %s12, 1
      %p67 = por %p65, %p66
      %p68 = scmp.ne.s32.totalorder %s60, %s63
      %p69 = scmp.eq.s32.totalorder %s12, 0
      %p70 = por %p68, %p69
      %p71 = scmp.ne.s32.totalorder %s60, %s63
      %p72 = scmp.eq.s32.totalorder %s17, 1
      %p73 = por %p71, %p72
      %p74 = scmp.ne.s32.totalorder %s63, %s64
      %p75 = scmp.eq.s32.totalorder %s17, 0
      %p76 = por %p74, %p75
      %p77 = scmp.ne.s32.totalorder %s63, %s64
      %p78 = scmp.eq.s32.totalorder %s18, 1
      %p79 = por %p77, %p78
      %p81 = scmp.ne.s32.totalorder %s64, %s80
      %p82 = scmp.eq.s32.totalorder %s18, 0
      %p83 = por %p81, %p82
      %s84 = ssub.s32 %s19, %s31
      %p85 = scmp.eq.s32.totalorder %s84, 0
      %s87 = sadd.s32 %s86, 1
      %s88 = scalar_select %p85, %s86, %s87
      %p91 = pneg %p85
      %p92 = scmp.eq.s32.totalorder %s12, 1
      %p93 = por %p91, %p92
      %p94 = scmp.ne.s32.totalorder %s86, %s89
      %p95 = scmp.eq.s32.totalorder %s12, 0
      %p96 = por %p94, %p95
      %p97 = scmp.ne.s32.totalorder %s86, %s89
      %p98 = scmp.eq.s32.totalorder %s17, 1
      %p99 = por %p97, %p98
      %p100 = scmp.ne.s32.totalorder %s89, %s90
      %p101 = scmp.eq.s32.totalorder %s17, 0
      %p102 = por %p100, %p101
      %p103 = scmp.ne.s32.totalorder %s89, %s90
      %p104 = scmp.eq.s32.totalorder %s18, 1
      %p105 = por %p103, %p104
      %p107 = scmp.ne.s32.totalorder %s90, %s106
      %p108 = scmp.eq.s32.totalorder %s18, 0
      %p109 = por %p107, %p108
      %p110 = scmp.le.s32.totalorder 1, %s12
      %p111 = scmp.lt.s32.totalorder %s12, 3
      %p112 = pnand %p110, %p111
      %p113 = pneg %p112
      // Predicated region
      $region9: #{tpu_custom_call.1} parent=5 // pred_check
        _
      $region10: #{tpu_custom_call.1} parent=5 // pred_check_branch
        %115 = sbr.rel (%p112) target = $region12
      $region11: #{tpu_custom_call.1} parent=5 // pred_region
        %s116 = ssub.s32 %s12, 1
        // Predicated region
        $region13: #{tpu_custom_call.1} parent=11 // pred_check
          %p117 = pneg %p76
        $region14: #{tpu_custom_call.1} parent=11 // pred_check_branch
          %119 = sbr.rel (%p117) target = $region16
        $region15: #{tpu_custom_call.1} parent=11 // pred_region
          %s120 = smul.u32 2, %s22
          %122 = vsyncadd [#allocation6], 0
          %s123 = smul.addr %s120, 8
          %s124 = scalar_lea.hbm %s1, %s123
          %s125 = sshll.u32 %s124, 4
          %s126 = int_to_ptr.hbm [resolvable:$true] %s125
          %s127 = sshll.u32 [#allocation5], 4
          %s128 = int_to_ptr.vmem [resolvable:$true] %s127
          %133 = dma.hbm_to_vmem [thread:$0]  %s126, 256, %s128, [#allocation6], 128, 128, 8
        $region16: #{tpu_custom_call.1} parent=11 // pred_fallthru
          _
      $region12: #{tpu_custom_call.1} parent=5 // pred_fallthru
        _
      %p134 = scmp.lt.s32.totalorder %s12, 2
      // Predicated region
      $region17: #{tpu_custom_call.1} parent=5 // pred_check
        %p135 = pneg %p134
      $region18: #{tpu_custom_call.1} parent=5 // pred_check_branch
        %137 = sbr.rel (%p135) target = $region20
      $region19: #{tpu_custom_call.1} parent=5 // pred_region
        // Predicated region
        $region21: #{tpu_custom_call.1} parent=19 // pred_check
          %p138 = pneg %p44
        $region22: #{tpu_custom_call.1} parent=19 // pred_check_branch
          %140 = sbr.rel (%p138) target = $region24
        $region23: #{tpu_custom_call.1} parent=19 // pred_region
          %s141 = sand.u32 %s34, 1
          %s142 = scalar_lea.sflag [#allocation4], %s141
          %s143 = sand.u32 %s34, 1
          %s144 = smul.addr %s143, 8
          %s145 = scalar_lea.vmem [#allocation3], %s144
          %147 = vsyncadd %s142, 0
          %s148 = smul.addr %s19, 8
          %s149 = scalar_lea.hbm %s0, %s148
          %s151 = sshll.u32 %s149, 4
          %s152 = int_to_ptr.hbm [resolvable:$true] %s151
          %s153 = sshll.u32 %s145, 4
          %s154 = int_to_ptr.vmem [resolvable:$true] %s153
          %156 = dma.hbm_to_vmem [thread:$0]  %s152, 128, %s154, %s142
        $region24: #{tpu_custom_call.1} parent=19 // pred_fallthru
          _
      $region20: #{tpu_custom_call.1} parent=5 // pred_fallthru
        _
      %p157 = scmp.le.s32.totalorder 1, %s12
      %p158 = scmp.lt.s32.totalorder %s12, 3
      %p159 = pnand %p157, %p158
      %p160 = pneg %p159
      // Predicated region
      $region25: #{tpu_custom_call.1} parent=5 // pred_check
        _
      $region26: #{tpu_custom_call.1} parent=5 // pred_check_branch
        %162 = sbr.rel (%p159) target = $region28
      $region27: #{tpu_custom_call.1} parent=5 // pred_region
        %s163 = ssub.s32 %s12, 1
        %s164 = sand.u32 %s37, 1
        %s165 = scalar_lea.sflag [#allocation4], %s164
        %s166 = sand.u32 %s37, 1
        %s167 = smul.addr %s166, 8
        %s168 = scalar_lea.vmem [#allocation3], %s167
        // Predicated region
        $region29: #{tpu_custom_call.1} parent=27 // pred_check
          %p169 = pneg %p50
        $region30: #{tpu_custom_call.1} parent=27 // pred_check_branch
          %171 = sbr.rel (%p169) target = $region32
        $region31: #{tpu_custom_call.1} parent=27 // pred_region
          %173 = dma.done %s165, 128
        $region32: #{tpu_custom_call.1} parent=27 // pred_fallthru
          _
        // Predicated region
        $region33: #{tpu_custom_call.1} parent=27 // pred_check
          %p174 = pneg %p76
        $region34: #{tpu_custom_call.1} parent=27 // pred_check_branch
          %176 = sbr.rel (%p174) target = $region36
        $region35: #{tpu_custom_call.1} parent=27 // pred_region
          %178 = dma.done [#allocation6], 256
        $region36: #{tpu_custom_call.1} parent=27 // pred_fallthru
          _
        %s179 = sand.u32 %s37, 1
        %s180 = scalar_lea.sflag [#allocation4], %s179
        %s181 = sand.u32 %s37, 1
        %s182 = smul.addr %s181, 8
        %s183 = scalar_lea.vmem [#allocation3], %s182
        %p184 = pneg %p50
        %p185 = pneg %p47
        %p186 = pneg %p76
        %p187 = pneg %p73
        %p188 = pneg %p102
        %p189 = pneg %p99
        %p190 = scmp.lt.s32.totalorder %s21, 1
        %s191 = scalar_select %p190, %s21, 1
        %s192 = smul.addr %s191, 8
        %s193 = scalar_lea.vmem %s2, %s192
        %s194 = smul.u32 2, %s22
        %p195 = scmp.lt.s32.totalorder %s21, 1
        %s196 = scalar_select %p195, %s21, 1
        %s197 = smul.addr %s196, 8
        %s198 = scalar_lea.vmem %s2, %s197
        %p199 = scmp.eq.s32.totalorder %s22, 0
        // Predicated region
        $region37: #{tpu_custom_call.1} parent=27 // pred_check
          %p200 = pneg %p199
        $region38: #{tpu_custom_call.1} parent=27 // pred_check_branch
          %202 = sbr.rel (%p200) target = $region40
        $region39: #{tpu_custom_call.1} parent=27 // pred_region
          %vm203 = vcmask 7168
          %204 = vst.msk [vmem:[#allocation2] sm:$0xff] %vm203, 0.0
        $region40: #{tpu_custom_call.1} parent=27 // pred_fallthru
          _
        %v205 = vld [vmem:[%s168] sm:$0xff]
        %v206 = vld [vmem:[#allocation5] sm:$0xff]
        %v207 = vld [vmem:[#allocation5 + $0x8] sm:$0xff]
        %208 = vmatpush.xpose.msra.mxu0 0.0
        %209 = vmatpush.xpose.msra.mxu0 0.0
        %210 = vmatpush.xpose.msra.mxu0 0.0
        %211 = vmatpush.xpose.msra.mxu0 0.0
        %212 = vmatpush.xpose.msra.mxu0 0.0
        %213 = vmatpush.xpose.msra.mxu0 0.0
        %214 = vmatpush.xpose.msra.mxu0 0.0
        %215 = vmatpush.xpose.msra.mxu0 0.0
        %216 = vmatpush.xpose.msra.mxu0 0.0
        %217 = vmatpush.xpose.msra.mxu0 0.0
        %218 = vmatpush.xpose.msra.mxu0 0.0
        %219 = vmatpush.xpose.msra.mxu0 0.0
        %220 = vmatpush.xpose.msra.mxu0 0.0
        %221 = vmatpush.xpose.msra.mxu0 0.0
        %222 = vmatpush.xpose.msra.mxu0 %v207
        %223 = vmatpush.xpose.msra.mxu0 %v206
        %224 = vmatmul.f32.gmra.mxu0 %v205
        %v225 = vpop.f32.mrf.mxu0
        %v226 = vadd.f32 0.0, %v225
        %227 = vdwg.mxu0
        %v228 = vsub.f32 %v226, 2.0
        %v229 = vmul.f32 %v228, 1.442695
        %v230 = vpow.pop %v229
        %v231 = vld [vmem:[#allocation2] sm:$0xff]
        %vm232 = vcmask 130048
        %v233 = vsel %vm232, %v230, 0.0
        %234 = vadd.xlane.f32.xlu0 %v233
        %v235 = vpop.xlane.xlu0 %234
        %v236 = vadd.f32 %v231, %v235
        %vm237 = vcmask 7168
        %238 = vst.msk [vmem:[#allocation2] sm:$0xff] %vm237, %v236
        %s239 = smul.u32 %s21, 8
        %s240 = sadd.s32 %s22, 1
        %s241 = smul.u32 %s240, 16
        %p242 = scmp.lt.s32.totalorder %s239, %s241
        %s243 = smul.u32 %s22, 16
        %s244 = sadd.s32 %s21, 1
        %s245 = smul.u32 %s244, 8
        %p246 = scmp.lt.s32.totalorder %s243, %s245
        %p247 = pnand %p242, %p246
        %p248 = pneg %p247
        // Predicated region
        $region41: #{tpu_custom_call.1} parent=27 // pred_check
          _
        $region42: #{tpu_custom_call.1} parent=27 // pred_check_branch
          %250 = sbr.rel (%p247) target = $region44
        $region43: #{tpu_custom_call.1} parent=27 // pred_region
          %v251 = vlaneseq
          %v252 = vshrl.u32 %v251, 7
          %v253 = vstv %s239
          %v254 = vadd.s32 %v253, %v252
          %v255 = vlaneseq
          %v256 = vand.u32 %v255, 127
          %v257 = vstv %s243
          %v258 = vadd.s32 %v257, %v256
          %v259 = vld [vmem:[#allocation2] sm:$0xff]
          %vm260 = vcmp.eq.s32.totalorder %v254, %v258
          %v261 = vsel %vm260, %v230, 0.0
          %v262 = vsel %vm232, %v261, 0.0
          %263 = vadd.xlane.f32.xlu0 %v262
          %v264 = vpop.xlane.xlu0 %263
          %v265 = vsub.f32 %v259, %v264
          %266 = vst.msk [vmem:[#allocation2] sm:$0xff] %vm237, %v265
        $region44: #{tpu_custom_call.1} parent=27 // pred_fallthru
          _
        // Predicated region
        $region45: #{tpu_custom_call.1} parent=27 // pred_check
          %p267 = pneg %p199
        $region46: #{tpu_custom_call.1} parent=27 // pred_check_branch
          %269 = sbr.rel (%p267) target = $region48
        $region47: #{tpu_custom_call.1} parent=27 // pred_region
          %v270 = vld [vmem:[#allocation2] sm:$0xff]
          %v271 = vlog2.pop %v270
          %v272 = vmul.f32 %v271, 0.6931472
          %v273 = vadd.f32 %v272, 2.0
          %274 = vst.msk [vmem:[%s198] sm:$0xff] %vm237, %v273
        $region48: #{tpu_custom_call.1} parent=27 // pred_fallthru
          _
        %p275 = scmp.lt.s32.totalorder %s21, 1
        %s276 = scalar_select %p275, %s21, 1
        %s277 = smul.addr %s276, 8
        %s278 = scalar_lea.vmem %s2, %s277
        // Predicated region
        $region49: #{tpu_custom_call.1} parent=27 // pred_check
          %p279 = pneg %p99
        $region50: #{tpu_custom_call.1} parent=27 // pred_check_branch
          %281 = sbr.rel (%p279) target = $region52
        $region51: #{tpu_custom_call.1} parent=27 // pred_region
          _
        $region52: #{tpu_custom_call.1} parent=27 // pred_fallthru
          _
      $region28: #{tpu_custom_call.1} parent=5 // pred_fallthru
        _
      %p282 = scmp.le.s32.totalorder 2, %s12
      // Predicated region
      $region53: #{tpu_custom_call.1} parent=5 // pred_check
        %p283 = pneg %p282
      $region54: #{tpu_custom_call.1} parent=5 // pred_check_branch
        %285 = sbr.rel (%p283) target = $region56
      $region55: #{tpu_custom_call.1} parent=5 // pred_region
        %s286 = ssub.s32 %s12, 2
        // Predicated region
        $region57: #{tpu_custom_call.1} parent=55 // pred_check
          %p287 = pneg %p105
        $region58: #{tpu_custom_call.1} parent=55 // pred_check_branch
          %289 = sbr.rel (%p287) target = $region60
        $region59: #{tpu_custom_call.1} parent=55 // pred_region
          %p290 = scmp.lt.s32.totalorder %s23, 1
          %s291 = scalar_select %p290, %s23, 1
          %s292 = smul.addr %s291, 8
          %s293 = scalar_lea.vmem %s2, %s292
        $region60: #{tpu_custom_call.1} parent=55 // pred_fallthru
          _
      $region56: #{tpu_custom_call.1} parent=5 // pred_fallthru
        _
    $region6: #{tpu_custom_call.1} parent=1 // loop_footer
      %s16 = sadd.s32 1, %s12
    $region7: #{tpu_custom_call.1} parent=1 // loop_footer_branch
      %11 = sbr.rel target = $region3
    $region8: #{tpu_custom_call.1} parent=1 // loop_exit
      _
    %294 = vsyncpa [#allocation4], 1
    %s295 = scalar_lea.sflag [#allocation4], 1
    %296 = vsyncpa %s295, 1
    %297 = vsyncpa [#allocation6], 1

</llo_original>
